<compile_context>
chip_gen: v7x
topology: tpu7x:2x2x1
jax: 0.10.0
libtpu: 0.0.40
codegen_flags: <defaults>
</compile_context>

<pallas_src>
import math

import jax
import jax.numpy as jnp
from jax.experimental import pallas as pl
from jax.experimental.pallas import tpu as pltpu


def _hbm_memcpy_kernel(x_hbm_ref, o_hbm_ref):
    # Pure materializing copy of the flattened (N, D) batch: one HBM->HBM DMA,
    # no VMEM staging, no grid.  This is all the compute BaseAE.preprocess
    # performs when an explicit copy is requested.
    def body(sem):
        cp = pltpu.make_async_copy(x_hbm_ref, o_hbm_ref, sem)
        cp.start()
        cp.wait()

    pl.run_scoped(body, pltpu.SemaphoreType.DMA)


def base_ae_preprocess(x: jax.Array) -> jax.Array:
    """Default (optimal) path: exact torch.flatten(x, start_dim=1) semantics.

    Row-major reshape is metadata-only on a contiguous array — zero HBM
    traffic, no kernel launch.
    """
    if x.ndim <= 2:
        return x
    return jnp.reshape(x, (x.shape[0], -1))


def base_ae_preprocess_pallas(x: jax.Array) -> jax.Array:
    """Pallas variant of BaseAE.preprocess that materializes the (N, D) copy.

    A single HBM->HBM async DMA (both operands in memory_space=pl.ANY):
    1 read + 1 write of the tensor, bound only by HBM bandwidth on
    v5e / v6e / v7x.  Matches torch.flatten(x, start_dim=1) exactly.
    """
    if x.ndim <= 2:
        return x

    n = x.shape[0]
    d = math.prod(x.shape[1:])

    # Metadata-only (bitcast) flatten; identical to torch.flatten(start_dim=1).
    x2 = jnp.reshape(x, (n, d))

    return pl.pallas_call(
        _hbm_memcpy_kernel,
        out_shape=jax.ShapeDtypeStruct((n, d), x2.dtype),
        in_specs=[pl.BlockSpec(memory_space=pl.ANY)],
        out_specs=pl.BlockSpec(memory_space=pl.ANY),
        compiler_params=pltpu.CompilerParams(has_side_effects=True),
    )(x2)


if __name__ == "__main__":
    key = jax.random.PRNGKey(0)

    # Small NCHW input consistent with an autoencoder image batch.
    x = jax.random.normal(key, (2, 4, 16, 16), dtype=jnp.float32)

    y = jax.block_until_ready(base_ae_preprocess_pallas(x))
    ref = base_ae_preprocess(x)  # metadata-only reference path
    assert y.shape == (2, 4 * 16 * 16), y.shape
    assert y.dtype == x.dtype
    assert bool(jnp.array_equal(y, ref)), "mismatch vs reference flatten"

    # Feature dim that is not a multiple of 128*16 and not lane-aligned per-row
    # tile caps (D = 3*32*32 = 3072): the raw DMA path is shape-agnostic.
    x_big = jax.random.normal(jax.random.PRNGKey(2), (2, 3, 32, 32), jnp.float32)
    y_big = jax.block_until_ready(base_ae_preprocess_pallas(x_big))
    assert y_big.shape == (2, 3 * 32 * 32)
    assert bool(jnp.array_equal(y_big, base_ae_preprocess(x_big)))

    # Odd, non-128-divisible flattened dim (D = 5*7*3 = 105) — still just a DMA.
    x_odd = jax.random.normal(jax.random.PRNGKey(3), (4, 5, 7, 3), jnp.float32)
    y_odd = jax.block_until_ready(base_ae_preprocess_pallas(x_odd))
    assert y_odd.shape == (4, 105)
    assert bool(jnp.array_equal(y_odd, base_ae_preprocess(x_odd)))

    # ndim <= 2 path: identity (no kernel, matching the PyTorch early return).
    x2d = jax.random.normal(jax.random.PRNGKey(1), (2, 32), dtype=jnp.float32)
    y2d = jax.block_until_ready(base_ae_preprocess_pallas(x2d))
    assert y2d.shape == (2, 32)
    assert bool(jnp.array_equal(y2d, x2d))

    print("KERNEL_OK")
</pallas_src>

<mosaic_0001>
module attributes {stable_mosaic.version = 11 : i64} {
  func.func @_hbm_memcpy_kernel(%arg0: memref<2x1024xf32, #tpu.memory_space<any>>, %arg1: memref<2x1024xf32, #tpu.memory_space<any>>) attributes {dimension_semantics = [], scalar_prefetch = 0 : i64, scratch_operands = 0 : i64, tpu.core_type = #tpu.core_type<tc>} {
    "tpu.region"() ({
      %0 = tpu.sem_alloc : memref<!tpu.dma_semaphore, #tpu.memory_space<semaphore_mem>>
      tpu.enqueue_dma source(%arg0 : memref<2x1024xf32, #tpu.memory_space<any>>) target(%arg1 : memref<2x1024xf32, #tpu.memory_space<any>>) target_semaphore(%0 : memref<!tpu.dma_semaphore, #tpu.memory_space<semaphore_mem>>)
      tpu.wait_dma2 semaphore(%0 : memref<!tpu.dma_semaphore, #tpu.memory_space<semaphore_mem>>) src(%arg0 : memref<2x1024xf32, #tpu.memory_space<any>>) dst(%arg1 : memref<2x1024xf32, #tpu.memory_space<any>>)
      tpu.yield
    }) : () -> ()
    return
  }
}

</mosaic_0001>

<llo_original>
// kernel: tpu_custom_call.1
$region0: #{tpu_custom_call.1}
  #allocation0 [shape = 'u32[]', space=smem, size = 0x4, offset = 0x4, fixed_abs, tag = 'smem constant byte address 0x4 - core index']
  #allocation1 [shape = 'u32[144,128]{1,0:T(1,128)}', space=vmem, size = 0x12000, scoped, tag = 'internal scratch']
  #allocation3 [shape = 's32[]', space=sflag, size = 0x4, offset = 0, fixed_abs, tag = 'sflag constant byte address 0x0 - dummy sync flag']
  #allocation4 [shape = 'u32[0]{0}', space=smem, size = 0, offset = 0, fixed_abs, tag = 'smem constant byte address 0x0 - null']
  %s0 = inlined_call_operand.hbm [shape: f32[2,1024], index: 0, kind: input, shape index: {}]
  %s1 = inlined_call_operand.hbm [shape: f32[2,1024], index: 1, kind: output, shape index: {}]
  %s2 = sld [smem:[#allocation0]]
  $region3: #{tpu_custom_call.1} parent=0
    _
  %s4 = ssub.s32 1, %s2
  %s5 = scalar_select 0, %s4, %s2
  $region2: #{tpu_custom_call.1} parent=0
    #allocation2 [shape = 's32[1]{0}', space=sflag, size = 0x4, scoped, tag = 'scoped memory for tpu_custom_call.1']
    %s7 = sshll.u32 1, 14
    %s8 = sxor.u32 4294967295, %s7
    %s11 = sshll.u32 3, 24
    %s12 = sxor.u32 4294967295, %s11
    %s13 = sand.u32 0, %s12
    %s15 = sor.u32 %s13, 0
    %18 = dma.general %s0, 256, %s1, [#allocation2], [#allocation3], [#allocation4], %s15, 0
    %s19 = smul.u32 2, 1
    %s20 = smul.u32 %s19, 8
    %s21 = sshll.u32 %s20, 4
    %22 = dma.done [#allocation2], %s21

</llo_original>
